<compile_context>
chip_gen: v7x
topology: tpu7x:2x2x1
jax: 0.10.0
libtpu: 0.0.40
codegen_flags: <defaults>
</compile_context>

<pallas_src>
import math

import numpy as np
import jax
import jax.numpy as jnp
from jax.experimental import pallas as pl
from jax.experimental.pallas import tpu as pltpu


_VMEM_TILE_BUDGET = 32 * 1024 * 1024   # bytes allotted to the streamed blocks
_VMEM_LIMIT_BYTES = 48 * 1024 * 1024   # scoped-VMEM limit (< v7x physical 64 MiB)
_TILE_CANDIDATES = (2048, 1024, 512, 256, 128)


def _round_up(v, m):
    return ((v + m - 1) // m) * m


# ----------------------------------------------------------------------------- #
# Pooling: 0/1 window-membership matrix + fp32 per-window 1/area.                #
# Reproduces torch AdaptiveAvgPool2d(p) + flatten + cat exactly.                 #
# ----------------------------------------------------------------------------- #
def build_pool_masks(h, w, pool_sizes=(1, 2, 4, 8)):
    rows, inv_area = [], []
    for p in pool_sizes:
        for i in range(p):
            h0 = (i * h) // p
            h1 = -((-(i + 1) * h) // p)          # ceil((i+1)*h/p)
            for j in range(p):
                w0 = (j * w) // p
                w1 = -((-(j + 1) * w) // p)
                r = np.zeros((h, w), dtype=np.float32)
                r[h0:h1, w0:w1] = 1.0
                rows.append(r.reshape(-1))
                inv_area.append(1.0 / ((h1 - h0) * (w1 - w0)))
    return np.stack(rows, axis=0), np.asarray(inv_area, dtype=np.float32)


def _select_tile(hw_p, per_col_bytes, requested=None):
    """Largest lane tile whose double-buffered blocks fit the VMEM budget."""
    if requested is not None:
        assert requested % 128 == 0 and hw_p % requested == 0, (
            f"tile {requested} must be a multiple of 128 dividing padded HW {hw_p}")
        return requested
    for t in _TILE_CANDIDATES:
        if hw_p % t == 0 and t * per_col_bytes <= _VMEM_TILE_BUDGET:
            return t
    return 128


# ----------------------------------------------------------------------------- #
# Stage 1: pooled key/value.  Grid (B, NSPLIT, K); reduction over the K axis.    #
# ----------------------------------------------------------------------------- #
def _kv_kernel(x_ref, pt_ref, wqv_ref, bqv_ref, slope_ref, inv_ref, kv_ref, acc_ref):
    # x_ref   : (C, TKV) io-dtype       pt_ref : (TKV, S) bf16 (0/1 windows)
    # wqv_ref : (Ck+Cv, C) bf16         bqv_ref/slope_ref: (Ck+Cv, 1) fp32
    # inv_ref : (1, S) fp32             kv_ref : (Ck+Cv, S) bf16 (finalized output)
    # acc_ref : (Ck+Cv, S) fp32 scratch accumulated over the k grid axis
    k = pl.program_id(2)

    xb = x_ref[...].astype(jnp.bfloat16)
    qv = jnp.dot(wqv_ref[...], xb, preferred_element_type=jnp.float32) + bqv_ref[...]
    # Per-row LeakyReLU slope: 0.2 on query/key rows, 1.0 on value rows.
    qv = jnp.where(qv < 0, qv * slope_ref[...], qv)

    # Adaptive average pooling == matmul with the 0/1 window matrix;
    # the per-window 1/area is applied once at finalize (exact, fp32).
    part = jnp.dot(qv.astype(jnp.bfloat16), pt_ref[...],
                   preferred_element_type=jnp.float32)                     # (Ck+Cv, S)

    @pl.when(k == 0)
    def _():
        acc_ref[...] = jnp.zeros_like(acc_ref)
    acc_ref[...] += part

    @pl.when(k == pl.num_programs(2) - 1)
    def _():
        kv_ref[...] = (acc_ref[...] * inv_ref[...]).astype(kv_ref.dtype)


# ----------------------------------------------------------------------------- #
# Stage 2: attention over pooled key/value.  Grid (B, HW//TQ), fully parallel.   #
# ----------------------------------------------------------------------------- #
def _attn_kernel(x_ref, key_ref, val_ref, wq_ref, bq_ref, wo_ref, bo_ref, o_ref):
    # x_ref : (C, TQ) io-dtype     key_ref: (S, Ck) bf16     val_ref: (Cv, S) bf16
    # wq_ref: (Ck, C) bf16         bq_ref : (Ck, 1) fp32
    # wo_ref: (C, Cv) bf16         bo_ref : (C, 1) fp32
    x_in = x_ref[...]
    x32 = x_in.astype(jnp.float32)            # residual in fp32
    xb = x_in.astype(jnp.bfloat16)

    q = jnp.dot(wq_ref[...], xb, preferred_element_type=jnp.float32) + bq_ref[...]
    q = jnp.where(q >= 0, q, 0.2 * q)                                      # (Ck, TQ)

    # scores (S, TQ): softmax over the sublane axis; lanes stay fully dense.
    s = jnp.dot(key_ref[...], q.astype(jnp.bfloat16),
                preferred_element_type=jnp.float32)                        # (S, TQ)
    m = jnp.max(s, axis=0, keepdims=True)
    e = jnp.exp(s - m)
    denom = jnp.sum(e, axis=0, keepdims=True)
    attn = (e * pl.reciprocal(denom, approx=True)).astype(jnp.bfloat16)    # (S, TQ)

    agg = jnp.dot(val_ref[...], attn, preferred_element_type=jnp.float32)  # (Cv, TQ)
    out = jnp.dot(wo_ref[...], agg.astype(jnp.bfloat16),
                  preferred_element_type=jnp.float32) + bo_ref[...] + x32  # (C, TQ)
    o_ref[...] = out.astype(o_ref.dtype)


# ----------------------------------------------------------------------------- #
# Wrapper                                                                        #
# ----------------------------------------------------------------------------- #
def nlblock_forward(x_nchw, params, pool_sizes=(1, 2, 4, 8),
                    tile_q=None, tile_kv=None):
    b, c, h, w = x_nchw.shape
    hw = h * w
    wq, bq, wv, bv, wo, bo = params            # PyTorch conv layouts: (Cout, Cin), (Cout,)
    ck, cv = wq.shape[0], wv.shape[0]
    io_dtype = x_nchw.dtype
    xbytes = x_nchw.dtype.itemsize

    x = x_nchw.reshape(b, c, hw)               # (B, C, HW) channels-first, no transpose

    # Pad HW to a lane-dense multiple of 128 (zero x columns + zero pooling weights).
    hw_p = _round_up(hw, 128)
    if hw_p != hw:
        x = jnp.pad(x, ((0, 0), (0, 0), (0, hw_p - hw)))

    mask, inv_area = build_pool_masks(h, w, pool_sizes)       # (S, HW) 0/1, (S,)
    s_total = mask.shape[0]
    pt_np = np.zeros((hw_p, s_total), dtype=np.float32)
    pt_np[:hw] = mask.T
    pt = jnp.asarray(pt_np, dtype=jnp.bfloat16)               # 0/1 exact in bf16
    inv = jnp.asarray(inv_area[None, :], dtype=jnp.float32)   # (1, S)

    # Fold the ck**-0.5 score scale into the shared query/key projection
    # (valid: LeakyReLU positively homogeneous, pooling linear).
    qscale = float(ck) ** -0.25
    wq_s, bq_s = wq * qscale, bq * qscale

    # Fused query/value projection for stage 1.
    w_qv = jnp.concatenate([wq_s, wv], axis=0).astype(jnp.bfloat16)          # (Ck+Cv, C)
    b_qv = jnp.concatenate([bq_s, bv], axis=0)[:, None].astype(jnp.float32)  # (Ck+Cv, 1)
    slope = jnp.concatenate([jnp.full((ck,), 0.2, jnp.float32),
                             jnp.ones((cv,), jnp.float32)])[:, None]         # (Ck+Cv, 1)

    # VMEM-aware tile selection (double-buffered blocks + intermediates <= budget).
    per_col_kv = 2 * (c * xbytes + s_total * 2) + (ck + cv) * 6
    per_col_q = 4 * c * xbytes + (ck + cv) * 6 + s_total * 10 + c * 4
    tkv = _select_tile(hw_p, per_col_kv, tile_kv)
    tq = _select_tile(hw_p, per_col_q, tile_q)

    n_steps = hw_p // tkv
    # Split the stage-1 reduction into 2 parallel chunks so both v7x TensorCores
    # have work even at B=1 (harmless on single-TC v5e/v6e).
    nsplit = 2 if n_steps % 2 == 0 else 1
    ksteps = n_steps // nsplit

    # ---- stage 1: pooled key / value -------------------------------------------------
    kv_part = pl.pallas_call(
        _kv_kernel,
        out_shape=jax.ShapeDtypeStruct((b * nsplit, ck + cv, s_total), jnp.bfloat16),
        grid_spec=pltpu.PrefetchScalarGridSpec(
            num_scalar_prefetch=0,
            grid=(b, nsplit, ksteps),
            in_specs=[
                pl.BlockSpec((None, c, tkv),
                             lambda i, sp, k: (i, 0, sp * ksteps + k)),      # x tile
                pl.BlockSpec((tkv, s_total),
                             lambda i, sp, k: (sp * ksteps + k, 0)),         # P^T tile
                pl.BlockSpec((ck + cv, c), lambda i, sp, k: (0, 0)),         # fused W
                pl.BlockSpec((ck + cv, 1), lambda i, sp, k: (0, 0)),         # fused b
                pl.BlockSpec((ck + cv, 1), lambda i, sp, k: (0, 0)),         # slope col
                pl.BlockSpec((1, s_total), lambda i, sp, k: (0, 0)),         # 1/area
            ],
            out_specs=pl.BlockSpec((None, ck + cv, s_total),
                                   lambda i, sp, k: (i * nsplit + sp, 0, 0)),
            scratch_shapes=[pltpu.VMEM((ck + cv, s_total), jnp.float32)]),
        compiler_params=pltpu.CompilerParams(
            dimension_semantics=("parallel", "parallel", "arbitrary"),
            vmem_limit_bytes=_VMEM_LIMIT_BYTES),
    )(x, pt, w_qv, b_qv, slope, inv)

    # Tiny merge of the split partials + per-batch rearrangement for stage 2.
    if nsplit > 1:
        kv = kv_part.reshape(b, nsplit, ck + cv, s_total).astype(jnp.float32)
        kv = kv.sum(axis=1).astype(jnp.bfloat16)                            # (B, Ck+Cv, S)
    else:
        kv = kv_part
    key_t = jnp.swapaxes(kv[:, :ck, :], 1, 2)                               # (B, S, Ck) bf16
    val = kv[:, ck:, :]                                                     # (B, Cv, S) bf16

    wq_b = jnp.asarray(wq_s, jnp.bfloat16)                                  # (Ck, C)
    bq_c = jnp.asarray(bq_s, jnp.float32)[:, None]                          # (Ck, 1)
    wo_b = jnp.asarray(wo, jnp.bfloat16)                                    # (C, Cv)
    bo_c = jnp.asarray(bo, jnp.float32)[:, None]                            # (C, 1)

    # ---- stage 2: attention + ConvOut + residual --------------------------------------
    out = pl.pallas_call(
        _attn_kernel,
        out_shape=jax.ShapeDtypeStruct((b, c, hw_p), io_dtype),
        grid_spec=pltpu.PrefetchScalarGridSpec(
            num_scalar_prefetch=0,
            grid=(b, hw_p // tq),
            in_specs=[
                pl.BlockSpec((None, c, tq), lambda i, j: (i, 0, j)),         # x tile
                pl.BlockSpec((None, s_total, ck), lambda i, j: (i, 0, 0)),   # pooled key^T
                pl.BlockSpec((None, cv, s_total), lambda i, j: (i, 0, 0)),   # pooled value
                pl.BlockSpec((ck, c), lambda i, j: (0, 0)),                  # wq (scaled)
                pl.BlockSpec((ck, 1), lambda i, j: (0, 0)),                  # bq (scaled)
                pl.BlockSpec((c, cv), lambda i, j: (0, 0)),                  # wo
                pl.BlockSpec((c, 1), lambda i, j: (0, 0)),                   # bo
            ],
            out_specs=pl.BlockSpec((None, c, tq), lambda i, j: (i, 0, j))),
        compiler_params=pltpu.CompilerParams(
            dimension_semantics=("parallel", "parallel"),
            vmem_limit_bytes=_VMEM_LIMIT_BYTES),
    )(x, key_t, val, wq_b, bq_c, wo_b, bo_c)

    if hw_p != hw:
        out = out[:, :, :hw]
    return out.reshape(b, c, h, w)


# ----------------------------------------------------------------------------- #
# Params / reference                                                             #
# ----------------------------------------------------------------------------- #
def init_params(key, in_channels, key_channels, value_channels, zero_conv_out=True):
    """Weights in PyTorch 1x1-conv layout: W (Cout, Cin), b (Cout,)."""
    k1, k2, k3, k4, k5, k6 = jax.random.split(key, 6)
    sq = 1.0 / math.sqrt(in_channels)
    wq = jax.random.normal(k1, (key_channels, in_channels), jnp.float32) * sq
    bq = jax.random.normal(k2, (key_channels,), jnp.float32) * sq
    wv = jax.random.normal(k3, (value_channels, in_channels), jnp.float32) * sq
    bv = jax.random.normal(k4, (value_channels,), jnp.float32) * sq
    if zero_conv_out:
        # Faithful to NLBlock.__init__ (ConvOut weight/bias zero-initialized).
        wo = jnp.zeros((in_channels, value_channels), jnp.float32)
        bo = jnp.zeros((in_channels,), jnp.float32)
    else:
        sv = 1.0 / math.sqrt(value_channels)
        wo = jax.random.normal(k5, (in_channels, value_channels), jnp.float32) * sv
        bo = jax.random.normal(k6, (in_channels,), jnp.float32) * sv
    return wq, bq, wv, bv, wo, bo


def nlblock_reference(x_nchw, params, pool_sizes=(1, 2, 4, 8)):
    """Pure-JAX fp32 reference of the PyTorch forward, for validation."""
    b, c, h, w = x_nchw.shape
    hw = h * w
    wq, bq, wv, bv, wo, bo = params
    ck = wq.shape[0]
    x = x_nchw.reshape(b, c, hw)                                   # (B, C, HW)
    mask, inv_area = build_pool_masks(h, w, pool_sizes)
    P = jnp.asarray(mask * inv_area[:, None])                      # (S, HW)
    q = jnp.einsum('kc,bcp->bkp', wq, x) + bq[None, :, None]
    q = jnp.where(q >= 0, q, 0.2 * q)                              # (B, Ck, HW)
    v = jnp.einsum('vc,bcp->bvp', wv, x) + bv[None, :, None]       # (B, Cv, HW)
    key = jnp.einsum('sp,bkp->bks', P, q)                          # (B, Ck, S)
    val = jnp.einsum('sp,bvp->bvs', P, v)                          # (B, Cv, S)
    scores = jnp.einsum('bkp,bks->bps', q, key) * (ck ** -0.5)     # (B, HW, S)
    attn = jax.nn.softmax(scores, axis=-1)
    agg = jnp.einsum('bps,bvs->bpv', attn, val)                    # (B, HW, Cv)
    out = jnp.einsum('cv,bpv->bcp', wo, agg) + bo[None, :, None] + x
    return out.reshape(b, c, h, w)


if __name__ == "__main__":
    B, C, H, W = 2, 8, 16, 16
    KEY_CH, VAL_CH = 8, 8

    root = jax.random.PRNGKey(0)
    kx, kp = jax.random.split(root)
    # bf16 activations at the HBM boundary (both stages are HBM-bound at real sizes).
    x = jax.random.normal(kx, (B, C, H, W), jnp.float32).astype(jnp.bfloat16)
    # Use non-zero ConvOut weights so validation exercises the full attention path
    # (the real module zero-inits ConvOut, which would make out == x trivially).
    params = init_params(kp, C, KEY_CH, VAL_CH, zero_conv_out=False)

    # tile_q/tile_kv chosen so the small test exercises multi-tile grids
    # (HW=256 -> split stage-1 reduction + 2 query tiles).
    out = nlblock_forward(x, params, tile_q=128, tile_kv=128)
    out = jax.block_until_ready(out)

    ref = nlblock_reference(x.astype(jnp.float32), params)
    assert out.shape == (B, C, H, W)
    out32 = out.astype(jnp.float32)
    max_err = float(jnp.max(jnp.abs(out32 - ref)))
    # bf16 activations/matmul operands + approx reciprocal -> loosened tolerance.
    assert jnp.allclose(out32, ref, atol=6e-2, rtol=6e-2), f"max abs err {max_err}"

    print("KERNEL_OK")
</pallas_src>

<mosaic_0001>
module attributes {stable_mosaic.version = 11 : i64} {
  func.func @_kv_kernel(%arg0: i32, %arg1: i32, %arg2: i32, %arg3: memref<1x8x128xbf16, #tpu.memory_space<vmem>>, %arg4: memref<128x85xbf16, #tpu.memory_space<vmem>>, %arg5: memref<16x8xbf16, #tpu.memory_space<vmem>>, %arg6: memref<16x1xf32, #tpu.memory_space<vmem>>, %arg7: memref<16x1xf32, #tpu.memory_space<vmem>>, %arg8: memref<1x85xf32, #tpu.memory_space<vmem>>, %arg9: memref<1x16x85xbf16, #tpu.memory_space<vmem>>, %arg10: memref<16x85xf32, #tpu.memory_space<vmem>>) attributes {dimension_semantics = [#tpu.dimension_semantics<parallel>, #tpu.dimension_semantics<parallel>, #tpu.dimension_semantics<arbitrary>], iteration_bounds = array<i64: 2, 2, 1>, scalar_prefetch = 0 : i64, scratch_operands = 1 : i64, tpu.core_type = #tpu.core_type<tc>, window_params = [{transform_indices = @transform_0, window_bounds = array<i64: 1, 8, 128>}, {transform_indices = @transform_1, window_bounds = array<i64: 128, 85>}, {pipeline_mode = #tpu.pipeline_mode<synchronous>, transform_indices = @transform_2, window_bounds = array<i64: 16, 8>}, {pipeline_mode = #tpu.pipeline_mode<synchronous>, transform_indices = @transform_3, window_bounds = array<i64: 16, 1>}, {pipeline_mode = #tpu.pipeline_mode<synchronous>, transform_indices = @transform_4, window_bounds = array<i64: 16, 1>}, {pipeline_mode = #tpu.pipeline_mode<synchronous>, transform_indices = @transform_5, window_bounds = array<i64: 1, 85>}, {transform_indices = @transform_6, window_bounds = array<i64: 1, 16, 85>}]} {
    %c0 = arith.constant 0 : index
    %c0_0 = arith.constant 0 : index
    %c0_1 = arith.constant 0 : index
    %0 = vector.load %arg3[%c0, %c0_0, %c0_1] : memref<1x8x128xbf16, #tpu.memory_space<vmem>>, vector<1x8x128xbf16>
    %1 = vector.shape_cast %0 : vector<1x8x128xbf16> to vector<8x128xbf16>
    %c0_2 = arith.constant 0 : index
    %c0_3 = arith.constant 0 : index
    %2 = vector.load %arg5[%c0_2, %c0_3] : memref<16x8xbf16, #tpu.memory_space<vmem>>, vector<16x8xbf16>
    %cst = arith.constant dense<0.000000e+00> : vector<16x128xf32>
    %3 = tpu.matmul %2, %1, %cst {dimension_numbers = #tpu.dot_dimension_numbers<[1], [0], [0], [1], [0, 0, 1, 1], [], []>} : vector<16x8xbf16>, vector<8x128xbf16>, vector<16x128xf32> -> vector<16x128xf32>
    %c0_4 = arith.constant 0 : index
    %c0_5 = arith.constant 0 : index
    %4 = vector.load %arg6[%c0_4, %c0_5] : memref<16x1xf32, #tpu.memory_space<vmem>>, vector<16x1xf32>
    %5 = vector.broadcast %4 : vector<16x1xf32> to vector<16x128xf32>
    %6 = arith.addf %3, %5 : vector<16x128xf32>
    %cst_6 = arith.constant 0.000000e+00 : f32
    %7 = vector.broadcast %cst_6 : f32 to vector<16x128xf32>
    %8 = arith.cmpf olt, %6, %7 : vector<16x128xf32>
    %c0_7 = arith.constant 0 : index
    %c0_8 = arith.constant 0 : index
    %9 = vector.load %arg7[%c0_7, %c0_8] : memref<16x1xf32, #tpu.memory_space<vmem>>, vector<16x1xf32>
    %10 = vector.broadcast %9 : vector<16x1xf32> to vector<16x128xf32>
    %11 = arith.mulf %6, %10 : vector<16x128xf32>
    %12 = arith.select %8, %11, %6 : vector<16x128xi1>, vector<16x128xf32>
    %13 = arith.truncf %12 : vector<16x128xf32> to vector<16x128xbf16>
    %c0_9 = arith.constant 0 : index
    %c0_10 = arith.constant 0 : index
    %14 = vector.load %arg4[%c0_9, %c0_10] : memref<128x85xbf16, #tpu.memory_space<vmem>>, vector<128x85xbf16>
    %cst_11 = arith.constant dense<0.000000e+00> : vector<16x85xf32>
    %15 = tpu.matmul %13, %14, %cst_11 {dimension_numbers = #tpu.dot_dimension_numbers<[1], [0], [0], [1], [0, 0, 1, 1], [], []>} : vector<16x128xbf16>, vector<128x85xbf16>, vector<16x85xf32> -> vector<16x85xf32>
    %c0_i32 = arith.constant 0 : i32
    %16 = arith.cmpi eq, %arg2, %c0_i32 : i32
    %17 = arith.extui %16 : i1 to i32
    %c0_i32_12 = arith.constant 0 : i32
    %18 = arith.cmpi ne, %17, %c0_i32_12 : i32
    scf.if %18 {
      %cst_19 = arith.constant 0.000000e+00 : f32
      %25 = vector.broadcast %cst_19 : f32 to vector<16x85xf32>
      %c0_20 = arith.constant 0 : index
      %c0_21 = arith.constant 0 : index
      %26 = vector.load %arg10[%c0_20, %c0_21] : memref<16x85xf32, #tpu.memory_space<vmem>>, vector<16x85xf32>
      tpu.vector_store %arg10[%c0_20, %c0_21], %25 {strides = array<i32>} : memref<16x85xf32, #tpu.memory_space<vmem>>, vector<16x85xf32>,
    } else {
    }
    %c0_13 = arith.constant 0 : index
    %c0_14 = arith.constant 0 : index
    %19 = vector.load %arg10[%c0_13, %c0_14] : memref<16x85xf32, #tpu.memory_space<vmem>>, vector<16x85xf32>
    %20 = arith.addf %19, %15 : vector<16x85xf32>
    %c0_15 = arith.constant 0 : index
    %c0_16 = arith.constant 0 : index
    %21 = vector.load %arg10[%c0_15, %c0_16] : memref<16x85xf32, #tpu.memory_space<vmem>>, vector<16x85xf32>
    tpu.vector_store %arg10[%c0_15, %c0_16], %20 {strides = array<i32>} : memref<16x85xf32, #tpu.memory_space<vmem>>, vector<16x85xf32>,
    %c0_i32_17 = arith.constant 0 : i32
    %22 = arith.cmpi eq, %arg2, %c0_i32_17 : i32
    %23 = arith.extui %22 : i1 to i32
    %c0_i32_18 = arith.constant 0 : i32
    %24 = arith.cmpi ne, %23, %c0_i32_18 : i32
    scf.if %24 {
      %c0_19 = arith.constant 0 : index
      %c0_20 = arith.constant 0 : index
      %25 = vector.load %arg10[%c0_19, %c0_20] : memref<16x85xf32, #tpu.memory_space<vmem>>, vector<16x85xf32>
      %c0_21 = arith.constant 0 : index
      %c0_22 = arith.constant 0 : index
      %26 = vector.load %arg8[%c0_21, %c0_22] : memref<1x85xf32, #tpu.memory_space<vmem>>, vector<1x85xf32>
      %27 = vector.broadcast %26 : vector<1x85xf32> to vector<16x85xf32>
      %28 = arith.mulf %25, %27 : vector<16x85xf32>
      %29 = arith.truncf %28 : vector<16x85xf32> to vector<16x85xbf16>
      %c0_23 = arith.constant 0 : index
      %c0_24 = arith.constant 0 : index
      %c0_25 = arith.constant 0 : index
      %30 = vector.load %arg9[%c0_23, %c0_24, %c0_25] : memref<1x16x85xbf16, #tpu.memory_space<vmem>>, vector<1x16x85xbf16>
      %31 = vector.shape_cast %30 : vector<1x16x85xbf16> to vector<16x85xbf16>
      %32 = vector.shape_cast %29 : vector<16x85xbf16> to vector<1x16x85xbf16>
      tpu.vector_store %arg9[%c0_23, %c0_24, %c0_25], %32 {strides = array<i32>} : memref<1x16x85xbf16, #tpu.memory_space<vmem>>, vector<1x16x85xbf16>,
    } else {
    }
    return
  }
  func.func @transform_0(%arg0: i32, %arg1: i32, %arg2: i32) -> (i32, i32, i32) {
    %c1_i32 = arith.constant 1 : i32
    %0 = arith.muli %arg1, %c1_i32 : i32
    %1 = arith.addi %0, %arg2 : i32
    %c0_i32 = arith.constant 0 : i32
    %c0_i32_0 = arith.constant 0 : i32
    return %arg0, %c0_i32, %1 : i32, i32, i32
  }
  func.func @transform_1(%arg0: i32, %arg1: i32, %arg2: i32) -> (i32, i32) {
    %c1_i32 = arith.constant 1 : i32
    %0 = arith.muli %arg1, %c1_i32 : i32
    %1 = arith.addi %0, %arg2 : i32
    %c0_i32 = arith.constant 0 : i32
    %c0_i32_0 = arith.constant 0 : i32
    return %1, %c0_i32 : i32, i32
  }
  func.func @transform_2(%arg0: i32, %arg1: i32, %arg2: i32) -> (i32, i32) {
    %c0_i32 = arith.constant 0 : i32
    %c0_i32_0 = arith.constant 0 : i32
    %c0_i32_1 = arith.constant 0 : i32
    return %c0_i32, %c0_i32_0 : i32, i32
  }
  func.func @transform_3(%arg0: i32, %arg1: i32, %arg2: i32) -> (i32, i32) {
    %c0_i32 = arith.constant 0 : i32
    %c0_i32_0 = arith.constant 0 : i32
    %c0_i32_1 = arith.constant 0 : i32
    return %c0_i32, %c0_i32_0 : i32, i32
  }
  func.func @transform_4(%arg0: i32, %arg1: i32, %arg2: i32) -> (i32, i32) {
    %c0_i32 = arith.constant 0 : i32
    %c0_i32_0 = arith.constant 0 : i32
    %c0_i32_1 = arith.constant 0 : i32
    return %c0_i32, %c0_i32_0 : i32, i32
  }
  func.func @transform_5(%arg0: i32, %arg1: i32, %arg2: i32) -> (i32, i32) {
    %c0_i32 = arith.constant 0 : i32
    %c0_i32_0 = arith.constant 0 : i32
    %c0_i32_1 = arith.constant 0 : i32
    return %c0_i32, %c0_i32_0 : i32, i32
  }
  func.func @transform_6(%arg0: i32, %arg1: i32, %arg2: i32) -> (i32, i32, i32) {
    %c2_i32 = arith.constant 2 : i32
    %0 = arith.muli %arg0, %c2_i32 : i32
    %1 = arith.addi %0, %arg1 : i32
    %c0_i32 = arith.constant 0 : i32
    %c0_i32_0 = arith.constant 0 : i32
    %c0_i32_1 = arith.constant 0 : i32
    return %1, %c0_i32, %c0_i32_0 : i32, i32, i32
  }
}

</mosaic_0001>

<llo_original>
// kernel: tpu_custom_call.1
$region0: #{tpu_custom_call.1}
  #allocation0 [shape = 'u32[]', space=smem, size = 0x4, offset = 0x4, fixed_abs, tag = 'smem constant byte address 0x4 - core index']
  #allocation1 [shape = 'u32[144,128]{1,0:T(1,128)}', space=vmem, size = 0x12000, scoped, tag = 'internal scratch']
  #allocation2 [shape = 'f32[16,85]{1,0:T(8,128)}', space=vmem, size = 0x2000, scoped, tag = 'scratch operand']
  %s0 = inlined_call_operand.vmem [shape: bf16[2,8,256], index: 0, kind: input, shape index: {}]
  %s1 = inlined_call_operand.vmem [shape: bf16[256,85], index: 1, kind: input, shape index: {}]
  %s2 = inlined_call_operand.vmem [shape: bf16[16,8], index: 2, kind: input, shape index: {}]
  %s3 = inlined_call_operand.vmem [shape: f32[16,1], index: 3, kind: input, shape index: {}]
  %s4 = inlined_call_operand.vmem [shape: f32[16,1], index: 4, kind: input, shape index: {}]
  %s5 = inlined_call_operand.vmem [shape: f32[1,85], index: 5, kind: input, shape index: {}]
  %s6 = inlined_call_operand.hbm [shape: bf16[4,16,85], index: 6, kind: output, shape index: {}]
  %s7 = sld [smem:[#allocation0]]
  $region65: #{tpu_custom_call.1} parent=0
    _
  %s9 = ssub.s32 1, %s7
  %s10 = scalar_select 0, %s9, %s7
  $region1: #{tpu_custom_call.1} parent=0
    #allocation3 [shape = 'u8[8192]{0}', space=vmem, size = 0x2000, scoped, tag = 'output window, operand 0']
    #allocation4 [shape = 's32[2]{0}', space=sflag, size = 0x8, scoped, tag = 'scoped memory for tpu_custom_call.1']
    %11 = vsyncpa [#allocation4], 0
    %s12 = scalar_lea.sflag [#allocation4], 1
    %13 = vsyncpa %s12, 0
    loop: start=0, step=1, limit=6
    $region2: #{tpu_custom_call.1} parent=1 // loop_pre_header
      _
    $region3: #{tpu_custom_call.1} parent=1 // loop_header
      %s15 = sphi 0, %s19
      %p16 = scmp.ge.s32.totalorder %s15, 6
      %s22 = sphi 0, %s41
      %s23 = sphi 0, %s37
      %s24 = sphi 0, %s33
      %s25 = sphi 0, %s22
      %s26 = sphi 0, %s23
      %s27 = sphi 0, %s24
      %s28 = sphi 0, %s25
      %s29 = sphi 0, %s26
      %s30 = sphi 0, %s27
      %s48 = sphi 0, %s50
      %s51 = sphi 0, %s48
      %s52 = sphi 0, %s51
      %s68 = sphi 0, %s52
      %s76 = sphi 0, %s78
      %s79 = sphi 0, %s76
      %s80 = sphi 0, %s79
      %s96 = sphi 0, %s80
      %s100 = sphi 0, %s100
      %s102 = sphi 0, %s100
      %s103 = sphi 0, %s102
      %s117 = sphi 0, %s103
      %s121 = sphi 0, %s121
      %s123 = sphi 0, %s121
      %s124 = sphi 0, %s123
      %s138 = sphi 0, %s124
      %s142 = sphi 0, %s142
      %s144 = sphi 0, %s142
      %s145 = sphi 0, %s144
      %s159 = sphi 0, %s145
      %s163 = sphi 0, %s163
      %s165 = sphi 0, %s163
      %s166 = sphi 0, %s165
      %s180 = sphi 0, %s166
      %s190 = sphi 0, %s192
      %s193 = sphi 0, %s190
      %s194 = sphi 0, %s193
      %s210 = sphi 0, %s194
    $region4: #{tpu_custom_call.1} parent=1 // loop_header_branch
      %18 = sbr.rel (%p16) target = $region8
    $region5: #{tpu_custom_call.1} parent=1 // loop_body
      %s20 = ssub.s32 %s15, 1
      %s21 = ssub.s32 %s15, 2
      %s31 = sadd.s32 1, %s24
      %p32 = scmp.ge.s32.totalorder %s31, 1
      %s33 = scalar_select %p32, 0, %s31
      %s34 = sadd.s32 1, %s23
      %s35 = scalar_select %p32, %s34, %s23
      %p36 = scmp.ge.s32.totalorder %s35, 2
      %s37 = scalar_select %p36, 0, %s35
      %s38 = sadd.s32 1, %s22
      %s39 = scalar_select %p36, %s38, %s22
      %p40 = scmp.ge.s32.totalorder %s39, 2
      %s41 = scalar_select %p40, 0, %s39
      %s42 = sadd.s32 %s23, %s24
      %s43 = sadd.s32 %s37, %s33
      %s44 = ssub.s32 %s22, %s41
      %s45 = ssub.s32 %s42, %s43
      %s46 = sor.u32 %s44, %s45
      %p47 = scmp.eq.s32.totalorder %s46, 0
      %s49 = sadd.s32 %s48, 1
      %s50 = scalar_select %p47, %s48, %s49
      %p53 = pneg %p47
      %p54 = scmp.eq.s32.totalorder %s15, 3
      %p55 = por %p53, %p54
      %p56 = scmp.ne.s32.totalorder %s48, %s51
      %p57 = scmp.eq.s32.totalorder %s15, 0
      %p58 = por %p56, %p57
      %p59 = scmp.ne.s32.totalorder %s48, %s51
      %p60 = scmp.eq.s32.totalorder %s20, 3
      %p61 = por %p59, %p60
      %p62 = scmp.ne.s32.totalorder %s51, %s52
      %p63 = scmp.eq.s32.totalorder %s20, 0
      %p64 = por %p62, %p63
      %p65 = scmp.ne.s32.totalorder %s51, %s52
      %p66 = scmp.eq.s32.totalorder %s21, 3
      %p67 = por %p65, %p66
      %p69 = scmp.ne.s32.totalorder %s52, %s68
      %p70 = scmp.eq.s32.totalorder %s21, 0
      %p71 = por %p69, %p70
      %s72 = sadd.s32 %s23, %s24
      %s73 = sadd.s32 %s37, %s33
      %s74 = ssub.s32 %s72, %s73
      %p75 = scmp.eq.s32.totalorder %s74, 0
      %s77 = sadd.s32 %s76, 1
      %s78 = scalar_select %p75, %s76, %s77
      %p81 = pneg %p75
      %p82 = scmp.eq.s32.totalorder %s15, 3
      %p83 = por %p81, %p82
      %p84 = scmp.ne.s32.totalorder %s76, %s79
      %p85 = scmp.eq.s32.totalorder %s15, 0
      %p86 = por %p84, %p85
      %p87 = scmp.ne.s32.totalorder %s76, %s79
      %p88 = scmp.eq.s32.totalorder %s20, 3
      %p89 = por %p87, %p88
      %p90 = scmp.ne.s32.totalorder %s79, %s80
      %p91 = scmp.eq.s32.totalorder %s20, 0
      %p92 = por %p90, %p91
      %p93 = scmp.ne.s32.totalorder %s79, %s80
      %p94 = scmp.eq.s32.totalorder %s21, 3
      %p95 = por %p93, %p94
      %p97 = scmp.ne.s32.totalorder %s80, %s96
      %p98 = scmp.eq.s32.totalorder %s21, 0
      %p99 = por %p97, %p98
      %s101 = sadd.s32 %s100, 1
      %p104 = scmp.eq.s32.totalorder %s15, 3
      %p105 = scmp.ne.s32.totalorder %s100, %s102
      %p106 = scmp.eq.s32.totalorder %s15, 0
      %p107 = por %p105, %p106
      %p108 = scmp.ne.s32.totalorder %s100, %s102
      %p109 = scmp.eq.s32.totalorder %s20, 3
      %p110 = por %p108, %p109
      %p111 = scmp.ne.s32.totalorder %s102, %s103
      %p112 = scmp.eq.s32.totalorder %s20, 0
      %p113 = por %p111, %p112
      %p114 = scmp.ne.s32.totalorder %s102, %s103
      %p115 = scmp.eq.s32.totalorder %s21, 3
      %p116 = por %p114, %p115
      %p118 = scmp.ne.s32.totalorder %s103, %s117
      %p119 = scmp.eq.s32.totalorder %s21, 0
      %p120 = por %p118, %p119
      %s122 = sadd.s32 %s121, 1
      %p125 = scmp.eq.s32.totalorder %s15, 3
      %p126 = scmp.ne.s32.totalorder %s121, %s123
      %p127 = scmp.eq.s32.totalorder %s15, 0
      %p128 = por %p126, %p127
      %p129 = scmp.ne.s32.totalorder %s121, %s123
      %p130 = scmp.eq.s32.totalorder %s20, 3
      %p131 = por %p129, %p130
      %p132 = scmp.ne.s32.totalorder %s123, %s124
      %p133 = scmp.eq.s32.totalorder %s20, 0
      %p134 = por %p132, %p133
      %p135 = scmp.ne.s32.totalorder %s123, %s124
      %p136 = scmp.eq.s32.totalorder %s21, 3
      %p137 = por %p135, %p136
      %p139 = scmp.ne.s32.totalorder %s124, %s138
      %p140 = scmp.eq.s32.totalorder %s21, 0
      %p141 = por %p139, %p140
      %s143 = sadd.s32 %s142, 1
      %p146 = scmp.eq.s32.totalorder %s15, 3
      %p147 = scmp.ne.s32.totalorder %s142, %s144
      %p148 = scmp.eq.s32.totalorder %s15, 0
      %p149 = por %p147, %p148
      %p150 = scmp.ne.s32.totalorder %s142, %s144
      %p151 = scmp.eq.s32.totalorder %s20, 3
      %p152 = por %p150, %p151
      %p153 = scmp.ne.s32.totalorder %s144, %s145
      %p154 = scmp.eq.s32.totalorder %s20, 0
      %p155 = por %p153, %p154
      %p156 = scmp.ne.s32.totalorder %s144, %s145
      %p157 = scmp.eq.s32.totalorder %s21, 3
      %p158 = por %p156, %p157
      %p160 = scmp.ne.s32.totalorder %s145, %s159
      %p161 = scmp.eq.s32.totalorder %s21, 0
      %p162 = por %p160, %p161
      %s164 = sadd.s32 %s163, 1
      %p167 = scmp.eq.s32.totalorder %s15, 3
      %p168 = scmp.ne.s32.totalorder %s163, %s165
      %p169 = scmp.eq.s32.totalorder %s15, 0
      %p170 = por %p168, %p169
      %p171 = scmp.ne.s32.totalorder %s163, %s165
      %p172 = scmp.eq.s32.totalorder %s20, 3
      %p173 = por %p171, %p172
      %p174 = scmp.ne.s32.totalorder %s165, %s166
      %p175 = scmp.eq.s32.totalorder %s20, 0
      %p176 = por %p174, %p175
      %p177 = scmp.ne.s32.totalorder %s165, %s166
      %p178 = scmp.eq.s32.totalorder %s21, 3
      %p179 = por %p177, %p178
      %p181 = scmp.ne.s32.totalorder %s166, %s180
      %p182 = scmp.eq.s32.totalorder %s21, 0
      %p183 = por %p181, %p182
      %s184 = smul.u32 %s22, 2
      %s185 = sadd.s32 %s184, %s23
      %s186 = smul.u32 %s41, 2
      %s187 = sadd.s32 %s186, %s37
      %s188 = ssub.s32 %s185, %s187
      %p189 = scmp.eq.s32.totalorder %s188, 0
      %s191 = sadd.s32 %s190, 1
      %s192 = scalar_select %p189, %s190, %s191
      %p195 = pneg %p189
      %p196 = scmp.eq.s32.totalorder %s15, 3
      %p197 = por %p195, %p196
      %p198 = scmp.ne.s32.totalorder %s190, %s193
      %p199 = scmp.eq.s32.totalorder %s15, 0
      %p200 = por %p198, %p199
      %p201 = scmp.ne.s32.totalorder %s190, %s193
      %p202 = scmp.eq.s32.totalorder %s20, 3
      %p203 = por %p201, %p202
      %p204 = scmp.ne.s32.totalorder %s193, %s194
      %p205 = scmp.eq.s32.totalorder %s20, 0
      %p206 = por %p204, %p205
      %p207 = scmp.ne.s32.totalorder %s193, %s194
      %p208 = scmp.eq.s32.totalorder %s21, 3
      %p209 = por %p207, %p208
      %p211 = scmp.ne.s32.totalorder %s194, %s210
      %p212 = scmp.eq.s32.totalorder %s21, 0
      %p213 = por %p211, %p212
      %p214 = scmp.le.s32.totalorder 1, %s15
      %p215 = scmp.lt.s32.totalorder %s15, 5
      %p216 = pnand %p214, %p215
      %p217 = pneg %p216
      // Predicated region
      $region9: #{tpu_custom_call.1} parent=5 // pred_check
        _
      $region10: #{tpu_custom_call.1} parent=5 // pred_check_branch
        %219 = sbr.rel (%p216) target = $region12
      $region11: #{tpu_custom_call.1} parent=5 // pred_region
        %s220 = ssub.s32 %s15, 1
        // Predicated region
        $region13: #{tpu_custom_call.1} parent=11 // pred_check
          %p221 = pneg %p113
        $region14: #{tpu_custom_call.1} parent=11 // pred_check_branch
          %223 = sbr.rel (%p221) target = $region16
        $region15: #{tpu_custom_call.1} parent=11 // pred_region
          _
        $region16: #{tpu_custom_call.1} parent=11 // pred_fallthru
          _
        // Predicated region
        $region17: #{tpu_custom_call.1} parent=11 // pred_check
          %p224 = pneg %p134
        $region18: #{tpu_custom_call.1} parent=11 // pred_check_branch
          %226 = sbr.rel (%p224) target = $region20
        $region19: #{tpu_custom_call.1} parent=11 // pred_region
          _
        $region20: #{tpu_custom_call.1} parent=11 // pred_fallthru
          _
        // Predicated region
        $region21: #{tpu_custom_call.1} parent=11 // pred_check
          %p227 = pneg %p155
        $region22: #{tpu_custom_call.1} parent=11 // pred_check_branch
          %229 = sbr.rel (%p227) target = $region24
        $region23: #{tpu_custom_call.1} parent=11 // pred_region
          _
        $region24: #{tpu_custom_call.1} parent=11 // pred_fallthru
          _
        // Predicated region
        $region25: #{tpu_custom_call.1} parent=11 // pred_check
          %p230 = pneg %p176
        $region26: #{tpu_custom_call.1} parent=11 // pred_check_branch
          %232 = sbr.rel (%p230) target = $region28
        $region27: #{tpu_custom_call.1} parent=11 // pred_region
          _
        $region28: #{tpu_custom_call.1} parent=11 // pred_fallthru
          _
      $region12: #{tpu_custom_call.1} parent=5 // pred_fallthru
        _
      %p233 = scmp.lt.s32.totalorder %s15, 4
      // Predicated region
      $region29: #{tpu_custom_call.1} parent=5 // pred_check
        %p234 = pneg %p233
      $region30: #{tpu_custom_call.1} parent=5 // pred_check_branch
        %236 = sbr.rel (%p234) target = $region32
      $region31: #{tpu_custom_call.1} parent=5 // pred_region
        // Predicated region
        $region33: #{tpu_custom_call.1} parent=31 // pred_check
          %p237 = pneg %p58
        $region34: #{tpu_custom_call.1} parent=31 // pred_check_branch
          %239 = sbr.rel (%p237) target = $region36
        $region35: #{tpu_custom_call.1} parent=31 // pred_region
          %s240 = sadd.s32 %s23, %s24
          %p241 = scmp.lt.s32.totalorder %s22, 1
          %s242 = scalar_select %p241, %s22, 1
          %p243 = scmp.lt.s32.totalorder %s240, 1
          %s244 = scalar_select %p243, %s240, 1
          %s245 = smul.addr %s242, 2
          %s246 = sadd.s32 %s244, %s245
          %s247 = smul.addr %s246, 4
          %s248 = scalar_lea.vmem %s0, %s247
          %s249 = sadd.s32 %s23, %s24
        $region36: #{tpu_custom_call.1} parent=31 // pred_fallthru
          _
        // Predicated region
        $region37: #{tpu_custom_call.1} parent=31 // pred_check
          %p250 = pneg %p86
        $region38: #{tpu_custom_call.1} parent=31 // pred_check_branch
          %252 = sbr.rel (%p250) target = $region40
        $region39: #{tpu_custom_call.1} parent=31 // pred_region
          %s253 = sadd.s32 %s23, %s24
          %s254 = smul.u32 16, %s253
          %p255 = scmp.lt.s32.totalorder %s254, 31
          %s256 = scalar_select %p255, %s254, 31
          %s257 = smul.addr %s256, 4
          %s258 = scalar_lea.vmem %s1, %s257
          %s259 = sadd.s32 %s23, %s24
          %s260 = smul.u32 16, %s259
        $region40: #{tpu_custom_call.1} parent=31 // pred_fallthru
          _
      $region32: #{tpu_custom_call.1} parent=5 // pred_fallthru
        _
      %p261 = scmp.le.s32.totalorder 1, %s15
      %p262 = scmp.lt.s32.totalorder %s15, 5
      %p263 = pnand %p261, %p262
      %p264 = pneg %p263
      // Predicated region
      $region41: #{tpu_custom_call.1} parent=5 // pred_check
        _
      $region42: #{tpu_custom_call.1} parent=5 // pred_check_branch
        %266 = sbr.rel (%p263) target = $region44
      $region43: #{tpu_custom_call.1} parent=5 // pred_region
        %s267 = ssub.s32 %s15, 1
        %s268 = sadd.s32 %s26, %s27
        %p269 = scmp.lt.s32.totalorder %s25, 1
        %s270 = scalar_select %p269, %s25, 1
        %p271 = scmp.lt.s32.totalorder %s268, 1
        %s272 = scalar_select %p271, %s268, 1
        %s273 = smul.addr %s270, 2
        %s274 = sadd.s32 %s272, %s273
        %s275 = smul.addr %s274, 4
        %s276 = scalar_lea.vmem %s0, %s275
        %p277 = pneg %p64
        %p278 = pneg %p61
        %s279 = sadd.s32 %s26, %s27
        %s280 = smul.u32 16, %s279
        %p281 = scmp.lt.s32.totalorder %s280, 31
        %s282 = scalar_select %p281, %s280, 31
        %s283 = smul.addr %s282, 4
        %s284 = scalar_lea.vmem %s1, %s283
        %p285 = pneg %p92
        %p286 = pneg %p89
        %p287 = pneg %p113
        %p288 = pneg %p110
        %p289 = pneg %p134
        %p290 = pneg %p131
        %p291 = pneg %p155
        %p292 = pneg %p152
        %p293 = pneg %p176
        %p294 = pneg %p173
        %p295 = pneg %p206
        %p296 = pneg %p203
        %s297 = sand.u32 %s193, 1
        %s298 = scalar_lea.sflag [#allocation4], %s297
        %s299 = sand.u32 %s193, 1
        %s300 = smul.addr %s299, 8
        %s301 = scalar_lea.vmem [#allocation3], %s300
        %s302 = sadd.s32 %s26, %s27
        %p303 = scmp.lt.s32.totalorder %s25, 1
        %s304 = scalar_select %p303, %s25, 1
        %p305 = scmp.lt.s32.totalorder %s302, 1
        %s306 = scalar_select %p305, %s302, 1
        %s307 = smul.addr %s304, 2
        %s308 = sadd.s32 %s306, %s307
        %s309 = smul.addr %s308, 4
        %s310 = scalar_lea.vmem %s0, %s309
        %s311 = sadd.s32 %s26, %s27
        %s312 = sadd.s32 %s26, %s27
        %s313 = smul.u32 16, %s312
        %p314 = scmp.lt.s32.totalorder %s313, 31
        %s315 = scalar_select %p314, %s313, 31
        %s316 = smul.addr %s315, 4
        %s317 = scalar_lea.vmem %s1, %s316
        %s318 = sadd.s32 %s26, %s27
        %s319 = smul.u32 16, %s318
        %s320 = smul.u32 %s25, 2
        %s321 = sadd.s32 %s320, %s26
        %v323 = vld [vmem:[%s310] sm:$0xf]
        %v324 = vld [vmem:[%s2] sm:$0xf]
        %v325 = vld [vmem:[%s2 + $0x4] sm:$0xf]
        %v326 = vld [vmem:[%s3] sm:$0xff]
        %v327 = vld [vmem:[%s3 + $0x8] sm:$0xff]
        %329 = vset.pattern.permute.xlu0 0
        %330 = vperm.xlu0 %329, %v326
        %v331 = vpop.permute.xlu0 %330
        %334 = vset.pattern.permute.xlu0 0
        %335 = vperm.xlu0 %334, %v327
        %v336 = vpop.permute.xlu0 %335
        %v340 = vunpack.c.l.b16 %v324
        %v341 = vunpack.c.l.b16 %v325
        %v342 = vpack.c.b16 %v341, %v340
        %vm343 = vcmask 64512
        %v345 = vsel %vm343, %v342, 0
        %vm347 = vcmask 1043456
        %v349 = vsel %vm347, %v323, 0
        %351 = vmatprep.subr.bf16.mxu0 0
        %352 = vmatpush1.bf16.msra.mxu0 %v349
        %353 = vmatprep.subr.bf16.mxu0 0
        %354 = vmatpush1.bf16.msra.mxu0 0
        %355 = vmatprep.subr.bf16.mxu0 0
        %356 = vmatpush1.bf16.msra.mxu0 0
        %357 = vmatprep.subr.bf16.mxu0 0
        %358 = vmatpush1.bf16.msra.mxu0 0
        %359 = vmatprep.subr.bf16.mxu0 0
        %360 = vmatpush1.bf16.msra.mxu0 0
        %361 = vmatprep.subr.bf16.mxu0 0
        %362 = vmatpush1.bf16.msra.mxu0 0
        %363 = vmatprep.subr.bf16.mxu0 0
        %364 = vmatpush1.bf16.msra.mxu0 0
        %365 = vmatprep.subr.bf16.mxu0 0
        %366 = vmatpush1.bf16.msra.mxu0 0
        %367 = vmatprep.subr.bf16.mxu0 0
        %368 = vmatpush1.bf16.msra.mxu0 0
        %369 = vmatprep.subr.bf16.mxu0 0
        %370 = vmatpush1.bf16.msra.mxu0 0
        %371 = vmatprep.subr.bf16.mxu0 0
        %372 = vmatpush1.bf16.msra.mxu0 0
        %373 = vmatprep.subr.bf16.mxu0 0
        %374 = vmatpush1.bf16.msra.mxu0 0
        %375 = vmatprep.subr.bf16.mxu0 0
        %376 = vmatpush1.bf16.msra.mxu0 0
        %377 = vmatprep.subr.bf16.mxu0 0
        %378 = vmatpush1.bf16.msra.mxu0 0
        %379 = vmatprep.subr.bf16.mxu0 0
        %380 = vmatpush1.bf16.msra.mxu0 0
        %381 = vmatprep.subr.bf16.mxu0 0
        %382 = vmatpush1.bf16.msra.mxu0 0
        %383 = vmatprep.mubr.bf16.mxu0 0
        %384 = vmatmul.mubr.bf16.gmra.mrb[0].mxu0 %v345
        %v385 = vpop.f32.mrb[0].mxu0
        %v386 = vadd.f32 %v331, %v385
        %v387 = vpop.f32.mrb[0].mxu0
        %v388 = vpop.f32.mrb[0].mxu0
        %v389 = vadd.f32 %v336, %v388
        %v390 = vpop.f32.mrb[0].mxu0
        %391 = vdwg.mxu0
        %vm392 = vcmp.lt.f32.partialorder %v386, 0.0
        %vm393 = vcmp.lt.f32.partialorder %v389, 0.0
        %v394 = vld [vmem:[%s4] sm:$0xff]
        %v395 = vld [vmem:[%s4 + $0x8] sm:$0xff]
        %397 = vset.pattern.permute.xlu0 0
        %398 = vperm.xlu0 %397, %v394
        %v399 = vpop.permute.xlu0 %398
        %402 = vset.pattern.permute.xlu0 0
        %403 = vperm.xlu0 %402, %v395
        %v404 = vpop.permute.xlu0 %403
        %v406 = vmul.f32 %v386, %v399
        %v407 = vmul.f32 %v389, %v404
        %v408 = vsel %vm392, %v406, %v386
        %v409 = vsel %vm393, %v407, %v389
        %v410 = vpack.c.bf16 %v409, %v408
        %v411 = vld [vmem:[%s317] sm:$0xf]
        %v412 = vld [vmem:[%s317 + $0x4] sm:$0xf]
        %v413 = vld [vmem:[%s317 + $0x8] sm:$0xf]
        %v414 = vld [vmem:[%s317 + $0xc] sm:$0xf]
        %v415 = vld [vmem:[%s317 + $0x10] sm:$0xf]
        %v416 = vld [vmem:[%s317 + $0x14] sm:$0xf]
        %v417 = vld [vmem:[%s317 + $0x18] sm:$0xf]
        %v418 = vld [vmem:[%s317 + $0x1c] sm:$0xf]
        %v419 = vld [vmem:[%s317 + $0x20] sm:$0xf]
        %v420 = vld [vmem:[%s317 + $0x24] sm:$0xf]
        %v421 = vld [vmem:[%s317 + $0x28] sm:$0xf]
        %v422 = vld [vmem:[%s317 + $0x2c] sm:$0xf]
        %v423 = vld [vmem:[%s317 + $0x30] sm:$0xf]
        %v424 = vld [vmem:[%s317 + $0x34] sm:$0xf]
        %v425 = vld [vmem:[%s317 + $0x38] sm:$0xf]
        %v426 = vld [vmem:[%s317 + $0x3c] sm:$0xf]
        %v443 = vunpack.c.l.b16 %v411
        %v444 = vunpack.c.l.b16 %v412
        %v445 = vunpack.c.l.b16 %v413
        %v446 = vunpack.c.l.b16 %v414
        %v447 = vunpack.c.l.b16 %v415
        %v448 = vunpack.c.l.b16 %v416
        %v449 = vunpack.c.l.b16 %v417
        %v450 = vunpack.c.l.b16 %v418
        %v451 = vunpack.c.l.b16 %v419
        %v452 = vunpack.c.l.b16 %v420
        %v453 = vunpack.c.l.b16 %v421
        %v454 = vunpack.c.l.b16 %v422
        %v455 = vunpack.c.l.b16 %v423
        %v456 = vunpack.c.l.b16 %v424
        %v457 = vunpack.c.l.b16 %v425
        %v458 = vunpack.c.l.b16 %v426
        %v459 = vpack.c.b16 %v444, %v443
        %v460 = vpack.c.b16 %v446, %v445
        %v461 = vpack.c.b16 %v448, %v447
        %v462 = vpack.c.b16 %v450, %v449
        %v463 = vpack.c.b16 %v452, %v451
        %v464 = vpack.c.b16 %v454, %v453
        %v465 = vpack.c.b16 %v456, %v455
        %v466 = vpack.c.b16 %v458, %v457
        %475 = vmatprep.subr.bf16.mxu0 0
        %476 = vmatpush1.bf16.msra.mxu0 %v459
        %477 = vmatprep.subr.bf16.mxu0 0
        %478 = vmatpush1.bf16.msra.mxu0 %v460
        %479 = vmatprep.subr.bf16.mxu0 0
        %480 = vmatpush1.bf16.msra.mxu0 %v461
        %481 = vmatprep.subr.bf16.mxu0 0
        %482 = vmatpush1.bf16.msra.mxu0 %v462
        %483 = vmatprep.subr.bf16.mxu0 0
        %484 = vmatpush1.bf16.msra.mxu0 %v463
        %485 = vmatprep.subr.bf16.mxu0 0
        %486 = vmatpush1.bf16.msra.mxu0 %v464
        %487 = vmatprep.subr.bf16.mxu0 0
        %488 = vmatpush1.bf16.msra.mxu0 %v465
        %489 = vmatprep.subr.bf16.mxu0 0
        %490 = vmatpush1.bf16.msra.mxu0 %v466
        %491 = vmatprep.subr.bf16.mxu0 0
        %492 = vmatpush1.bf16.msra.mxu0 0
        %493 = vmatprep.subr.bf16.mxu0 0
        %494 = vmatpush1.bf16.msra.mxu0 0
        %495 = vmatprep.subr.bf16.mxu0 0
        %496 = vmatpush1.bf16.msra.mxu0 0
        %497 = vmatprep.subr.bf16.mxu0 0
        %498 = vmatpush1.bf16.msra.mxu0 0
        %499 = vmatprep.subr.bf16.mxu0 0
        %500 = vmatpush1.bf16.msra.mxu0 0
        %501 = vmatprep.subr.bf16.mxu0 0
        %502 = vmatpush1.bf16.msra.mxu0 0
        %503 = vmatprep.subr.bf16.mxu0 0
        %504 = vmatpush1.bf16.msra.mxu0 0
        %505 = vmatprep.subr.bf16.mxu0 0
        %506 = vmatpush1.bf16.msra.mxu0 0
        %507 = vmatprep.mubr.bf16.mxu0 0
        %508 = vmatmul.mubr.bf16.gmra.mrb[0].mxu0 %v410
        %v509 = vpop.f32.mrb[0].mxu0
        %v510 = vadd.f32 0.0, %v509
        %v511 = vpop.f32.mrb[0].mxu0
        %v512 = vpop.f32.mrb[0].mxu0
        %v513 = vadd.f32 0.0, %v512
        %v514 = vpop.f32.mrb[0].mxu0
        %515 = vdwg.mxu0
        %p516 = scmp.eq.s32.totalorder %s27, 0
        // Predicated region
        $region45: #{tpu_custom_call.1} parent=43 // pred_check
          %p517 = pneg %p516
        $region46: #{tpu_custom_call.1} parent=43 // pred_check_branch
          %519 = sbr.rel (%p517) target = $region48
        $region47: #{tpu_custom_call.1} parent=43 // pred_region
          %vm520 = vcmask 695296
          %521 = vst.msk [vmem:[#allocation2] sm:$0xff] %vm520, 0.0
          %522 = vst.msk [vmem:[#allocation2 + $0x8] sm:$0xff] %vm520, 0.0
        $region48: #{tpu_custom_call.1} parent=43 // pred_fallthru
          _
        %v523 = vld [vmem:[#allocation2] sm:$0xff]
        %v524 = vld [vmem:[#allocation2 + $0x8] sm:$0xff]
        %v525 = vadd.f32 %v523, %v510
        %v526 = vadd.f32 %v524, %v513
        %vm527 = vcmask 695296
        %528 = vst.msk [vmem:[#allocation2] sm:$0xff] %vm527, %v525
        %529 = vst.msk [vmem:[#allocation2 + $0x8] sm:$0xff] %vm527, %v526
        // Predicated region
        $region49: #{tpu_custom_call.1} parent=43 // pred_check
          %p530 = pneg %p516
        $region50: #{tpu_custom_call.1} parent=43 // pred_check_branch
          %532 = sbr.rel (%p530) target = $region52
        $region51: #{tpu_custom_call.1} parent=43 // pred_region
          %v533 = vld [vmem:[#allocation2] sm:$0xff]
          %v534 = vld [vmem:[#allocation2 + $0x8] sm:$0xff]
          %v535 = vld [vmem:[%s5] sm:$0x1]
          %v537 = vlaneseq
          %v538 = vshrl.u32 %v537, 7
          %v539 = vsub.s32 0, %v538
          %v540 = vrot.slane %v535, %v539
          %v542 = vmul.f32 %v533, %v540
          %v543 = vmul.f32 %v534, %v540
          %v544 = vpack.c.bf16 %v543, %v542
          %v546 = vunpack.c.l.b16 %v544
          %v547 = vunpack.c.h.b16 %v544
          %v548 = vpack.c.b16 %v546, %v546
          %v549 = vpack.c.b16 %v547, %v547
          %vm552 = vcmask 691200
          %553 = vst.msk [vmem:[%s301] sm:$0xf] %vm552, %v548
          %554 = vst.msk [vmem:[%s301 + $0x4] sm:$0xf] %vm552, %v549
        $region52: #{tpu_custom_call.1} parent=43 // pred_fallthru
          _
        %s555 = sand.u32 %s193, 1
        %s556 = scalar_lea.sflag [#allocation4], %s555
        %s557 = sand.u32 %s193, 1
        %s558 = smul.addr %s557, 8
        %s559 = scalar_lea.vmem [#allocation3], %s558
        // Predicated region
        $region53: #{tpu_custom_call.1} parent=43 // pred_check
          %p560 = pneg %p203
        $region54: #{tpu_custom_call.1} parent=43 // pred_check_branch
          %562 = sbr.rel (%p560) target = $region56
        $region55: #{tpu_custom_call.1} parent=43 // pred_region
          %s563 = smul.u32 %s25, 2
          %s564 = sadd.s32 %s563, %s26
          %s566 = ssub.s32 128, 128
          %567 = vsyncadd %s556, %s566
          %s568 = smul.addr %s564, 2
          %s569 = smul.addr %s568, 64
          %s570 = scalar_lea.hbm %s6, %s569
          %s571 = sshll.u32 %s559, 4
          %s572 = int_to_ptr.vmem [resolvable:$true] %s571
          %577 = dma.vmem_to_hbm [thread:$0]  %s572, 128, %s570, %s556, 64, 64, 4
        $region56: #{tpu_custom_call.1} parent=43 // pred_fallthru
          _
      $region44: #{tpu_custom_call.1} parent=5 // pred_fallthru
        _
      %p578 = scmp.le.s32.totalorder 2, %s15
      // Predicated region
      $region57: #{tpu_custom_call.1} parent=5 // pred_check
        %p579 = pneg %p578
      $region58: #{tpu_custom_call.1} parent=5 // pred_check_branch
        %581 = sbr.rel (%p579) target = $region60
      $region59: #{tpu_custom_call.1} parent=5 // pred_region
        %s582 = ssub.s32 %s15, 2
        // Predicated region
        $region61: #{tpu_custom_call.1} parent=59 // pred_check
          %p583 = pneg %p209
        $region62: #{tpu_custom_call.1} parent=59 // pred_check_branch
          %585 = sbr.rel (%p583) target = $region64
        $region63: #{tpu_custom_call.1} parent=59 // pred_region
          %s586 = sand.u32 %s194, 1
          %s587 = scalar_lea.sflag [#allocation4], %s586
          %s588 = sand.u32 %s194, 1
          %s589 = smul.addr %s588, 8
          %s590 = scalar_lea.vmem [#allocation3], %s589
          %591 = dma.done %s587, 128
        $region64: #{tpu_custom_call.1} parent=59 // pred_fallthru
          _
      $region60: #{tpu_custom_call.1} parent=5 // pred_fallthru
        _
    $region6: #{tpu_custom_call.1} parent=1 // loop_footer
      %s19 = sadd.s32 1, %s15
    $region7: #{tpu_custom_call.1} parent=1 // loop_footer_branch
      %14 = sbr.rel target = $region3
    $region8: #{tpu_custom_call.1} parent=1 // loop_exit
      _
    %592 = vsyncpa [#allocation4], 1
    %s593 = scalar_lea.sflag [#allocation4], 1
    %594 = vsyncpa %s593, 1

</llo_original>
